<compile_context>
chip_gen: v7x
topology: tpu7x:2x2x1
jax: 0.10.0
libtpu: 0.0.40
codegen_flags: <defaults>
</compile_context>

<pallas_src>
import functools
import math

import jax
import jax.numpy as jnp
from jax import lax
from jax.experimental import pallas as pl
from jax.experimental.pallas import tpu as pltpu

_EPS = 1e-5


# ----------------------------- in-kernel helpers ----------------------------

def _stacked_reflect_taps(x2, masks, H, W):
    """All 9 reflect-padded 3x3 taps of x2 (Cin, HW), stacked to (9*Cin, HW).

    Tap order t = (dy+1)*3 + (dx+1) matches the PyTorch OIHW kernel position
    (ky, kx).  Interior shifts are pltpu.roll lane rotations (XLU); the
    reflect-pad boundary rows/columns are fixed up with per-lane selects.
    Roll semantics match jnp.roll: result[p] = x[p - shift]."""
    HW = H * W
    m_c0, m_cl, m_r0, m_rl = masks

    # Row shifts, hoisted once (wrapped rows are junk but always masked away).
    down = pltpu.roll(x2, W, axis=1)         # x[row-1, col]
    up = pltpu.roll(x2, HW - W, axis=1)      # x[row+1, col]
    rows = (
        jnp.where(m_r0, up, down),           # dy = -1 : row 0 reflects to row 1
        x2,                                  # dy =  0
        jnp.where(m_rl, down, up),           # dy = +1 : row H-1 reflects to row H-2
    )

    taps = []
    for xr in rows:
        # Column shifts hoisted once per row-shifted image, reused for dx=+/-1.
        left = pltpu.roll(xr, 1, axis=1)         # x[., col-1]
        right = pltpu.roll(xr, HW - 1, axis=1)   # x[., col+1]
        taps.append(jnp.where(m_c0, right, left))   # dx = -1 : col 0 -> col 1
        taps.append(xr)                              # dx =  0
        taps.append(jnp.where(m_cl, left, right))   # dx = +1 : col W-1 -> col W-2
    return jnp.concatenate(taps, axis=0)             # (9*Cin, HW)


def _conv3x3_reflect(x2, w_ref, masks, H, W, matmul_dtype):
    """3x3 reflect-pad conv as ONE matmul: (Cout, 9*Cin) @ (9*Cin, HW) -> f32."""
    taps = _stacked_reflect_taps(x2, masks, H, W).astype(matmul_dtype)
    return jnp.dot(w_ref[...], taps, preferred_element_type=jnp.float32)


def _instance_norm(v, inv_hw):
    """PyTorch-default InstanceNorm2d (affine=False, biased var, eps=1e-5).
    Fused single-pass statistics: sum and sum-of-squares together."""
    s1 = jnp.sum(v, axis=1, keepdims=True)
    s2 = jnp.sum(v * v, axis=1, keepdims=True)
    mu = s1 * inv_hw
    var = jnp.maximum(s2 * inv_hw - mu * mu, 0.0)
    return (v - mu) * lax.rsqrt(var + _EPS)


# --------------------------------- kernel -----------------------------------

def resnet_block_kernel(x_ref, w1_ref, w2_ref, o_ref, *, H, W, matmul_dtype):
    HW = H * W
    x2 = x_ref[0].astype(jnp.float32)                 # (C, HW), lane-dense

    # Reflection-boundary masks from an in-kernel iota (no HBM index plane);
    # shape (1, HW), broadcast over channels inside jnp.where.
    idx = lax.broadcasted_iota(jnp.int32, (1, HW), 1)
    col = idx % W
    masks = (col == 0, col == W - 1, idx < W, idx >= (H - 1) * W)
    inv_hw = jnp.float32(1.0 / HW)

    # conv1 -> InstanceNorm -> ReLU.  (Dropout is identity in eval mode; the
    # conv bias is exactly cancelled by the affine-free InstanceNorm.)
    y = _conv3x3_reflect(x2, w1_ref, masks, H, W, matmul_dtype)
    y = jnp.maximum(_instance_norm(y, inv_hw), 0.0)

    # conv2 -> InstanceNorm -> residual add.
    z = _conv3x3_reflect(y, w2_ref, masks, H, W, matmul_dtype)
    z = _instance_norm(z, inv_hw)

    o_ref[0] = (x2 + z).astype(o_ref.dtype)           # single dense (C, HW) store


# -------------------------------- wrapper ------------------------------------

def resnet_block(x, w1, b1, w2, b2, *, matmul_dtype=jnp.float32):
    """x: (N, C, H, W) f32; w*: (Cout, Cin, 3, 3) PyTorch OIHW; b*: (C,).

    matmul_dtype=jnp.bfloat16 is the throughput option for v6e/v7x (f32
    accumulation is kept via preferred_element_type); default f32 preserves
    1e-4 parity with the PyTorch/JAX reference.
    """
    del b1, b2  # exactly cancelled by InstanceNorm's mean subtraction
    N, C, H, W = x.shape
    HW = H * W

    x3 = x.reshape(N, C, HW)                          # lane-dense spatial axis

    def pack_w(w):  # OIHW -> (Cout, 9*Cin), tap-major index t = ky*3 + kx
        return jnp.transpose(w, (0, 2, 3, 1)).reshape(C, 9 * C).astype(matmul_dtype)

    w1p, w2p = pack_w(w1), pack_w(w2)

    kernel = functools.partial(resnet_block_kernel, H=H, W=W,
                               matmul_dtype=matmul_dtype)

    itemsize = jnp.dtype(x.dtype).itemsize
    w_itemsize = jnp.dtype(matmul_dtype).itemsize
    # Rough per-step VMEM: double-buffered x/out blocks + two double-buffered
    # weight slabs + stacked taps + live f32 intermediates.
    per_step = (4 * C * HW * itemsize
                + 4 * 9 * C * C * w_itemsize
                + 16 * C * HW * 4)
    vmem_limit = int(min(64 << 20, max(32 << 20, per_step * 5 // 4)))

    flops = N * (2 * 2 * 9 * C * C * HW + 20 * C * HW)
    bytes_accessed = 2 * N * C * HW * itemsize + 2 * 9 * C * C * w_itemsize

    out = pl.pallas_call(
        kernel,
        out_shape=jax.ShapeDtypeStruct((N, C, HW), x.dtype),
        grid_spec=pltpu.PrefetchScalarGridSpec(
            num_scalar_prefetch=0,
            grid=(N,),
            in_specs=[
                pl.BlockSpec((1, C, HW), lambda n: (n, 0, 0)),   # x, lane-dense
                pl.BlockSpec((C, 9 * C), lambda n: (0, 0)),      # conv1 weights
                pl.BlockSpec((C, 9 * C), lambda n: (0, 0)),      # conv2 weights
            ],
            out_specs=pl.BlockSpec((1, C, HW), lambda n: (n, 0, 0)),
        ),
        compiler_params=pltpu.CompilerParams(
            dimension_semantics=("parallel",),
            vmem_limit_bytes=vmem_limit),
        cost_estimate=pl.CostEstimate(
            flops=flops,
            transcendentals=2 * N * C,
            bytes_accessed=bytes_accessed),
    )(x3, w1p, w2p)

    return out.reshape(N, C, H, W)


# ------------------------------ pure-JAX ref ---------------------------------

def _ref_resnet_block(x, w1, b1, w2, b2):
    def block(h, w, b, relu):
        hp = jnp.pad(h, ((0, 0), (0, 0), (1, 1), (1, 1)), mode="reflect")
        y = jax.lax.conv_general_dilated(
            hp, w, (1, 1), "VALID",
            dimension_numbers=("NCHW", "OIHW", "NCHW"))
        y = y + b[None, :, None, None]
        mu = y.mean(axis=(2, 3), keepdims=True)
        var = jnp.square(y - mu).mean(axis=(2, 3), keepdims=True)
        y = (y - mu) / jnp.sqrt(var + _EPS)
        return jnp.maximum(y, 0.0) if relu else y

    h = block(x, w1, b1, True)
    h = block(h, w2, b2, False)
    return x + h


# --------------------------------- main --------------------------------------

if __name__ == "__main__":
    N, C, H, W = 2, 4, 16, 16  # dim = 4

    key = jax.random.PRNGKey(0)
    kx, k1, k2, k3, k4 = jax.random.split(key, 5)

    fan_in = C * 3 * 3
    bound = 1.0 / math.sqrt(fan_in)  # PyTorch Conv2d default init bounds
    x = jax.random.normal(kx, (N, C, H, W), jnp.float32)
    w1 = jax.random.uniform(k1, (C, C, 3, 3), jnp.float32, -bound, bound)
    b1 = jax.random.uniform(k2, (C,), jnp.float32, -bound, bound)
    w2 = jax.random.uniform(k3, (C, C, 3, 3), jnp.float32, -bound, bound)
    b2 = jax.random.uniform(k4, (C,), jnp.float32, -bound, bound)

    out = resnet_block(x, w1, b1, w2, b2)
    out = jax.block_until_ready(out)

    ref = _ref_resnet_block(x, w1, b1, w2, b2)
    if not jnp.allclose(out, ref, atol=1e-4, rtol=1e-4):
        raise AssertionError("Pallas ResnetBlock does not match JAX reference")

    print("KERNEL_OK")
</pallas_src>

<mosaic_0001>
module attributes {stable_mosaic.version = 11 : i64} {
  func.func @resnet_block_kernel(%arg0: i32, %arg1: memref<1x4x256xf32, #tpu.memory_space<vmem>>, %arg2: memref<4x36xf32, #tpu.memory_space<vmem>>, %arg3: memref<4x36xf32, #tpu.memory_space<vmem>>, %arg4: memref<1x4x256xf32, #tpu.memory_space<vmem>>) attributes {dimension_semantics = [#tpu.dimension_semantics<parallel>], iteration_bounds = array<i64: 2>, scalar_prefetch = 0 : i64, scratch_operands = 0 : i64, tpu.core_type = #tpu.core_type<tc>, window_params = [{transform_indices = @transform_0, window_bounds = array<i64: 1, 4, 256>}, {pipeline_mode = #tpu.pipeline_mode<synchronous>, transform_indices = @transform_1, window_bounds = array<i64: 4, 36>}, {pipeline_mode = #tpu.pipeline_mode<synchronous>, transform_indices = @transform_2, window_bounds = array<i64: 4, 36>}, {transform_indices = @transform_3, window_bounds = array<i64: 1, 4, 256>}]} {
    %c0 = arith.constant 0 : index
    %c0_0 = arith.constant 0 : index
    %c0_1 = arith.constant 0 : index
    %0 = vector.load %arg1[%c0, %c0_0, %c0_1] : memref<1x4x256xf32, #tpu.memory_space<vmem>>, vector<1x4x256xf32>
    %1 = vector.shape_cast %0 : vector<1x4x256xf32> to vector<4x256xf32>
    %2 = tpu.iota {dimensions = array<i32: 1>} : vector<1x256xi32>
    %c16_i32 = arith.constant 16 : i32
    %c0_i32 = arith.constant 0 : i32
    %3 = arith.cmpi eq, %c16_i32, %c0_i32 : i32
    %c1_i32 = arith.constant 1 : i32
    %4 = arith.select %3, %c1_i32, %c16_i32 : i32
    %5 = vector.broadcast %4 : i32 to vector<1x256xi32>
    %6 = arith.remsi %2, %5 : vector<1x256xi32>
    %c0_i32_2 = arith.constant 0 : i32
    %7 = vector.broadcast %c0_i32_2 : i32 to vector<1x256xi32>
    %8 = arith.cmpi ne, %6, %7 : vector<1x256xi32>
    %c0_i32_3 = arith.constant 0 : i32
    %9 = vector.broadcast %c0_i32_3 : i32 to vector<1x256xi32>
    %10 = arith.cmpi slt, %6, %9 : vector<1x256xi32>
    %c0_i32_4 = arith.constant 0 : i32
    %11 = arith.cmpi slt, %4, %c0_i32_4 : i32
    %12 = vector.broadcast %11 : i1 to vector<1x256xi1>
    %13 = vector.broadcast %12 : vector<1x256xi1> to vector<1x256xi1>
    %14 = arith.xori %10, %13 : vector<1x256xi1>
    %15 = arith.andi %14, %8 : vector<1x256xi1>
    %16 = vector.broadcast %4 : i32 to vector<1x256xi32>
    %17 = arith.addi %6, %16 : vector<1x256xi32>
    %18 = arith.select %15, %17, %6 : vector<1x256xi1>, vector<1x256xi32>
    %c0_i32_5 = arith.constant 0 : i32
    %19 = vector.broadcast %c0_i32_5 : i32 to vector<1x256xi32>
    %20 = arith.cmpi eq, %18, %19 : vector<1x256xi32>
    %c15_i32 = arith.constant 15 : i32
    %21 = vector.broadcast %c15_i32 : i32 to vector<1x256xi32>
    %22 = arith.cmpi eq, %18, %21 : vector<1x256xi32>
    %c16_i32_6 = arith.constant 16 : i32
    %23 = vector.broadcast %c16_i32_6 : i32 to vector<1x256xi32>
    %24 = arith.cmpi slt, %2, %23 : vector<1x256xi32>
    %c240_i32 = arith.constant 240 : i32
    %25 = vector.broadcast %c240_i32 : i32 to vector<1x256xi32>
    %26 = arith.cmpi sge, %2, %25 : vector<1x256xi32>
    %c16_i32_7 = arith.constant 16 : i32
    %27 = tpu.dynamic_rotate %1 by %c16_i32_7 dim 1 : vector<4x256xf32>, i32 -> vector<4x256xf32>
    %c240_i32_8 = arith.constant 240 : i32
    %28 = tpu.dynamic_rotate %1 by %c240_i32_8 dim 1 : vector<4x256xf32>, i32 -> vector<4x256xf32>
    %29 = vector.shape_cast %24 : vector<1x256xi1> to vector<1x256xi1>
    %30 = vector.broadcast %29 : vector<1x256xi1> to vector<4x256xi1>
    %31 = arith.select %30, %28, %27 : vector<4x256xi1>, vector<4x256xf32>
    %32 = vector.shape_cast %26 : vector<1x256xi1> to vector<1x256xi1>
    %33 = vector.broadcast %32 : vector<1x256xi1> to vector<4x256xi1>
    %34 = arith.select %33, %27, %28 : vector<4x256xi1>, vector<4x256xf32>
    %c1_i32_9 = arith.constant 1 : i32
    %35 = tpu.dynamic_rotate %31 by %c1_i32_9 dim 1 : vector<4x256xf32>, i32 -> vector<4x256xf32>
    %c255_i32 = arith.constant 255 : i32
    %36 = tpu.dynamic_rotate %31 by %c255_i32 dim 1 : vector<4x256xf32>, i32 -> vector<4x256xf32>
    %37 = vector.shape_cast %20 : vector<1x256xi1> to vector<1x256xi1>
    %38 = vector.broadcast %37 : vector<1x256xi1> to vector<4x256xi1>
    %39 = arith.select %38, %36, %35 : vector<4x256xi1>, vector<4x256xf32>
    %40 = vector.shape_cast %22 : vector<1x256xi1> to vector<1x256xi1>
    %41 = vector.broadcast %40 : vector<1x256xi1> to vector<4x256xi1>
    %42 = arith.select %41, %35, %36 : vector<4x256xi1>, vector<4x256xf32>
    %c1_i32_10 = arith.constant 1 : i32
    %43 = tpu.dynamic_rotate %1 by %c1_i32_10 dim 1 : vector<4x256xf32>, i32 -> vector<4x256xf32>
    %c255_i32_11 = arith.constant 255 : i32
    %44 = tpu.dynamic_rotate %1 by %c255_i32_11 dim 1 : vector<4x256xf32>, i32 -> vector<4x256xf32>
    %45 = vector.shape_cast %20 : vector<1x256xi1> to vector<1x256xi1>
    %46 = vector.broadcast %45 : vector<1x256xi1> to vector<4x256xi1>
    %47 = arith.select %46, %44, %43 : vector<4x256xi1>, vector<4x256xf32>
    %48 = vector.shape_cast %22 : vector<1x256xi1> to vector<1x256xi1>
    %49 = vector.broadcast %48 : vector<1x256xi1> to vector<4x256xi1>
    %50 = arith.select %49, %43, %44 : vector<4x256xi1>, vector<4x256xf32>
    %c1_i32_12 = arith.constant 1 : i32
    %51 = tpu.dynamic_rotate %34 by %c1_i32_12 dim 1 : vector<4x256xf32>, i32 -> vector<4x256xf32>
    %c255_i32_13 = arith.constant 255 : i32
    %52 = tpu.dynamic_rotate %34 by %c255_i32_13 dim 1 : vector<4x256xf32>, i32 -> vector<4x256xf32>
    %53 = vector.shape_cast %20 : vector<1x256xi1> to vector<1x256xi1>
    %54 = vector.broadcast %53 : vector<1x256xi1> to vector<4x256xi1>
    %55 = arith.select %54, %52, %51 : vector<4x256xi1>, vector<4x256xf32>
    %56 = vector.shape_cast %22 : vector<1x256xi1> to vector<1x256xi1>
    %57 = vector.broadcast %56 : vector<1x256xi1> to vector<4x256xi1>
    %58 = arith.select %57, %51, %52 : vector<4x256xi1>, vector<4x256xf32>
    %59 = tpu.concatenate %39, %31, %42, %47, %1, %50, %55, %34, %58 in 0 : vector<4x256xf32>, vector<4x256xf32>, vector<4x256xf32>, vector<4x256xf32>, vector<4x256xf32>, vector<4x256xf32>, vector<4x256xf32>, vector<4x256xf32>, vector<4x256xf32> -> vector<36x256xf32>
    %c0_14 = arith.constant 0 : index
    %c0_15 = arith.constant 0 : index
    %60 = vector.load %arg2[%c0_14, %c0_15] : memref<4x36xf32, #tpu.memory_space<vmem>>, vector<4x36xf32>
    %cst = arith.constant dense<0.000000e+00> : vector<4x256xf32>
    %61 = tpu.matmul %60, %59, %cst {dimension_numbers = #tpu.dot_dimension_numbers<[1], [0], [0], [1], [0, 0, 1, 1], [], []>} : vector<4x36xf32>, vector<36x256xf32>, vector<4x256xf32> -> vector<4x256xf32>
    %cst_16 = arith.constant dense<0.000000e+00> : vector<4xf32>
    %62 = vector.multi_reduction <add>, %61, %cst_16 [1] : vector<4x256xf32> to vector<4xf32>
    %63 = vector.shape_cast %62 : vector<4xf32> to vector<4x1xf32>
    %64 = arith.mulf %61, %61 : vector<4x256xf32>
    %cst_17 = arith.constant dense<0.000000e+00> : vector<4xf32>
    %65 = vector.multi_reduction <add>, %64, %cst_17 [1] : vector<4x256xf32> to vector<4xf32>
    %66 = vector.shape_cast %65 : vector<4xf32> to vector<4x1xf32>
    %cst_18 = arith.constant 3.906250e-03 : f32
    %67 = vector.broadcast %cst_18 : f32 to vector<4x1xf32>
    %68 = arith.mulf %63, %67 : vector<4x1xf32>
    %cst_19 = arith.constant 3.906250e-03 : f32
    %69 = vector.broadcast %cst_19 : f32 to vector<4x1xf32>
    %70 = arith.mulf %66, %69 : vector<4x1xf32>
    %71 = arith.mulf %68, %68 : vector<4x1xf32>
    %72 = arith.subf %70, %71 : vector<4x1xf32>
    %cst_20 = arith.constant 0.000000e+00 : f32
    %73 = vector.broadcast %cst_20 : f32 to vector<4x1xf32>
    %74 = arith.maximumf %72, %73 : vector<4x1xf32>
    %75 = vector.broadcast %68 : vector<4x1xf32> to vector<4x256xf32>
    %76 = arith.subf %61, %75 : vector<4x256xf32>
    %cst_21 = arith.constant 9.99999974E-6 : f32
    %77 = vector.broadcast %cst_21 : f32 to vector<4x1xf32>
    %78 = arith.addf %74, %77 : vector<4x1xf32>
    %79 = math.rsqrt %78 : vector<4x1xf32>
    %80 = vector.broadcast %79 : vector<4x1xf32> to vector<4x256xf32>
    %81 = arith.mulf %76, %80 : vector<4x256xf32>
    %cst_22 = arith.constant 0.000000e+00 : f32
    %82 = vector.broadcast %cst_22 : f32 to vector<4x256xf32>
    %83 = arith.maximumf %81, %82 : vector<4x256xf32>
    %c16_i32_23 = arith.constant 16 : i32
    %84 = tpu.dynamic_rotate %83 by %c16_i32_23 dim 1 : vector<4x256xf32>, i32 -> vector<4x256xf32>
    %c240_i32_24 = arith.constant 240 : i32
    %85 = tpu.dynamic_rotate %83 by %c240_i32_24 dim 1 : vector<4x256xf32>, i32 -> vector<4x256xf32>
    %86 = vector.shape_cast %24 : vector<1x256xi1> to vector<1x256xi1>
    %87 = vector.broadcast %86 : vector<1x256xi1> to vector<4x256xi1>
    %88 = arith.select %87, %85, %84 : vector<4x256xi1>, vector<4x256xf32>
    %89 = vector.shape_cast %26 : vector<1x256xi1> to vector<1x256xi1>
    %90 = vector.broadcast %89 : vector<1x256xi1> to vector<4x256xi1>
    %91 = arith.select %90, %84, %85 : vector<4x256xi1>, vector<4x256xf32>
    %c1_i32_25 = arith.constant 1 : i32
    %92 = tpu.dynamic_rotate %88 by %c1_i32_25 dim 1 : vector<4x256xf32>, i32 -> vector<4x256xf32>
    %c255_i32_26 = arith.constant 255 : i32
    %93 = tpu.dynamic_rotate %88 by %c255_i32_26 dim 1 : vector<4x256xf32>, i32 -> vector<4x256xf32>
    %94 = vector.shape_cast %20 : vector<1x256xi1> to vector<1x256xi1>
    %95 = vector.broadcast %94 : vector<1x256xi1> to vector<4x256xi1>
    %96 = arith.select %95, %93, %92 : vector<4x256xi1>, vector<4x256xf32>
    %97 = vector.shape_cast %22 : vector<1x256xi1> to vector<1x256xi1>
    %98 = vector.broadcast %97 : vector<1x256xi1> to vector<4x256xi1>
    %99 = arith.select %98, %92, %93 : vector<4x256xi1>, vector<4x256xf32>
    %c1_i32_27 = arith.constant 1 : i32
    %100 = tpu.dynamic_rotate %83 by %c1_i32_27 dim 1 : vector<4x256xf32>, i32 -> vector<4x256xf32>
    %c255_i32_28 = arith.constant 255 : i32
    %101 = tpu.dynamic_rotate %83 by %c255_i32_28 dim 1 : vector<4x256xf32>, i32 -> vector<4x256xf32>
    %102 = vector.shape_cast %20 : vector<1x256xi1> to vector<1x256xi1>
    %103 = vector.broadcast %102 : vector<1x256xi1> to vector<4x256xi1>
    %104 = arith.select %103, %101, %100 : vector<4x256xi1>, vector<4x256xf32>
    %105 = vector.shape_cast %22 : vector<1x256xi1> to vector<1x256xi1>
    %106 = vector.broadcast %105 : vector<1x256xi1> to vector<4x256xi1>
    %107 = arith.select %106, %100, %101 : vector<4x256xi1>, vector<4x256xf32>
    %c1_i32_29 = arith.constant 1 : i32
    %108 = tpu.dynamic_rotate %91 by %c1_i32_29 dim 1 : vector<4x256xf32>, i32 -> vector<4x256xf32>
    %c255_i32_30 = arith.constant 255 : i32
    %109 = tpu.dynamic_rotate %91 by %c255_i32_30 dim 1 : vector<4x256xf32>, i32 -> vector<4x256xf32>
    %110 = vector.shape_cast %20 : vector<1x256xi1> to vector<1x256xi1>
    %111 = vector.broadcast %110 : vector<1x256xi1> to vector<4x256xi1>
    %112 = arith.select %111, %109, %108 : vector<4x256xi1>, vector<4x256xf32>
    %113 = vector.shape_cast %22 : vector<1x256xi1> to vector<1x256xi1>
    %114 = vector.broadcast %113 : vector<1x256xi1> to vector<4x256xi1>
    %115 = arith.select %114, %108, %109 : vector<4x256xi1>, vector<4x256xf32>
    %116 = tpu.concatenate %96, %88, %99, %104, %83, %107, %112, %91, %115 in 0 : vector<4x256xf32>, vector<4x256xf32>, vector<4x256xf32>, vector<4x256xf32>, vector<4x256xf32>, vector<4x256xf32>, vector<4x256xf32>, vector<4x256xf32>, vector<4x256xf32> -> vector<36x256xf32>
    %c0_31 = arith.constant 0 : index
    %c0_32 = arith.constant 0 : index
    %117 = vector.load %arg3[%c0_31, %c0_32] : memref<4x36xf32, #tpu.memory_space<vmem>>, vector<4x36xf32>
    %cst_33 = arith.constant dense<0.000000e+00> : vector<4x256xf32>
    %118 = tpu.matmul %117, %116, %cst_33 {dimension_numbers = #tpu.dot_dimension_numbers<[1], [0], [0], [1], [0, 0, 1, 1], [], []>} : vector<4x36xf32>, vector<36x256xf32>, vector<4x256xf32> -> vector<4x256xf32>
    %cst_34 = arith.constant dense<0.000000e+00> : vector<4xf32>
    %119 = vector.multi_reduction <add>, %118, %cst_34 [1] : vector<4x256xf32> to vector<4xf32>
    %120 = vector.shape_cast %119 : vector<4xf32> to vector<4x1xf32>
    %121 = arith.mulf %118, %118 : vector<4x256xf32>
    %cst_35 = arith.constant dense<0.000000e+00> : vector<4xf32>
    %122 = vector.multi_reduction <add>, %121, %cst_35 [1] : vector<4x256xf32> to vector<4xf32>
    %123 = vector.shape_cast %122 : vector<4xf32> to vector<4x1xf32>
    %cst_36 = arith.constant 3.906250e-03 : f32
    %124 = vector.broadcast %cst_36 : f32 to vector<4x1xf32>
    %125 = arith.mulf %120, %124 : vector<4x1xf32>
    %cst_37 = arith.constant 3.906250e-03 : f32
    %126 = vector.broadcast %cst_37 : f32 to vector<4x1xf32>
    %127 = arith.mulf %123, %126 : vector<4x1xf32>
    %128 = arith.mulf %125, %125 : vector<4x1xf32>
    %129 = arith.subf %127, %128 : vector<4x1xf32>
    %cst_38 = arith.constant 0.000000e+00 : f32
    %130 = vector.broadcast %cst_38 : f32 to vector<4x1xf32>
    %131 = arith.maximumf %129, %130 : vector<4x1xf32>
    %132 = vector.broadcast %125 : vector<4x1xf32> to vector<4x256xf32>
    %133 = arith.subf %118, %132 : vector<4x256xf32>
    %cst_39 = arith.constant 9.99999974E-6 : f32
    %134 = vector.broadcast %cst_39 : f32 to vector<4x1xf32>
    %135 = arith.addf %131, %134 : vector<4x1xf32>
    %136 = math.rsqrt %135 : vector<4x1xf32>
    %137 = vector.broadcast %136 : vector<4x1xf32> to vector<4x256xf32>
    %138 = arith.mulf %133, %137 : vector<4x256xf32>
    %139 = arith.addf %1, %138 : vector<4x256xf32>
    %c0_40 = arith.constant 0 : index
    %c0_41 = arith.constant 0 : index
    %c0_42 = arith.constant 0 : index
    %140 = vector.load %arg4[%c0_40, %c0_41, %c0_42] : memref<1x4x256xf32, #tpu.memory_space<vmem>>, vector<1x4x256xf32>
    %141 = vector.shape_cast %140 : vector<1x4x256xf32> to vector<4x256xf32>
    %142 = vector.shape_cast %139 : vector<4x256xf32> to vector<1x4x256xf32>
    tpu.vector_store %arg4[%c0_40, %c0_41, %c0_42], %142 {strides = array<i32>} : memref<1x4x256xf32, #tpu.memory_space<vmem>>, vector<1x4x256xf32>,
    return
  }
  func.func @transform_0(%arg0: i32) -> (i32, i32, i32) {
    %c0_i32 = arith.constant 0 : i32
    %c0_i32_0 = arith.constant 0 : i32
    %c0_i32_1 = arith.constant 0 : i32
    return %arg0, %c0_i32, %c0_i32_0 : i32, i32, i32
  }
  func.func @transform_1(%arg0: i32) -> (i32, i32) {
    %c0_i32 = arith.constant 0 : i32
    %c0_i32_0 = arith.constant 0 : i32
    %c0_i32_1 = arith.constant 0 : i32
    return %c0_i32, %c0_i32_0 : i32, i32
  }
  func.func @transform_2(%arg0: i32) -> (i32, i32) {
    %c0_i32 = arith.constant 0 : i32
    %c0_i32_0 = arith.constant 0 : i32
    %c0_i32_1 = arith.constant 0 : i32
    return %c0_i32, %c0_i32_0 : i32, i32
  }
  func.func @transform_3(%arg0: i32) -> (i32, i32, i32) {
    %c0_i32 = arith.constant 0 : i32
    %c0_i32_0 = arith.constant 0 : i32
    %c0_i32_1 = arith.constant 0 : i32
    return %arg0, %c0_i32, %c0_i32_0 : i32, i32, i32
  }
}

</mosaic_0001>

<llo_original>
// kernel: tpu_custom_call.1
$region0: #{tpu_custom_call.1}
  #allocation0 [shape = 'u32[]', space=smem, size = 0x4, offset = 0x4, fixed_abs, tag = 'smem constant byte address 0x4 - core index']
  #allocation1 [shape = 'u32[144,128]{1,0:T(1,128)}', space=vmem, size = 0x12000, scoped, tag = 'internal scratch']
  %s0 = inlined_call_operand.hbm [shape: f32[2,4,256], index: 0, kind: input, shape index: {}]
  %s1 = inlined_call_operand.hbm [shape: f32[4,36], index: 1, kind: input, shape index: {}]
  %s2 = inlined_call_operand.vmem [shape: f32[4,36], index: 2, kind: input, shape index: {}]
  %s3 = inlined_call_operand.hbm [shape: f32[2,4,256], index: 3, kind: output, shape index: {}]
  %s4 = sld [smem:[#allocation0]]
  $region53: #{tpu_custom_call.1} parent=0
    _
  %s6 = ssub.s32 1, %s4
  %s7 = scalar_select 0, %s6, %s4
  $region1: #{tpu_custom_call.1} parent=0
    #allocation2 [shape = 'u8[8192]{0}', space=vmem, size = 0x2000, scoped, tag = 'input window, operand 0']
    #allocation3 [shape = 's32[2]{0}', space=sflag, size = 0x8, scoped, tag = 'scoped memory for tpu_custom_call.1']
    #allocation4 [shape = 's32[2]{0}', space=sflag, size = 0x8, scoped, tag = 'scoped memory for tpu_custom_call.1']
    #allocation5 [shape = 'u8[2048]{0}', space=vmem, size = 0x800, scoped, tag = 'input window, operand 1, single buffered']
    #allocation6 [shape = 's32[1]{0}', space=sflag, size = 0x4, scoped, tag = 'scoped memory for tpu_custom_call.1']
    #allocation7 [shape = 'u8[8192]{0}', space=vmem, size = 0x2000, scoped, tag = 'output window, operand 0']
    %8 = vsyncpa [#allocation3], 0
    %s9 = scalar_lea.sflag [#allocation3], 1
    %10 = vsyncpa %s9, 0
    %11 = vsyncpa [#allocation6], 0
    %12 = vsyncpa [#allocation4], 0
    %s13 = scalar_lea.sflag [#allocation4], 1
    %14 = vsyncpa %s13, 0
    loop: start=0, step=1, limit=4
    $region2: #{tpu_custom_call.1} parent=1 // loop_pre_header
      _
    $region3: #{tpu_custom_call.1} parent=1 // loop_header
      %s16 = sphi 0, %s20
      %p17 = scmp.ge.s32.totalorder %s16, 4
      %s26 = sphi 0, %s28
      %s29 = sphi 0, %s26
      %s30 = sphi 0, %s29
      %s46 = sphi 0, %s30
      %s50 = sphi 0, %s50
      %s52 = sphi 0, %s50
      %s53 = sphi 0, %s52
      %s67 = sphi 0, %s53
      %s71 = sphi 0, %s71
      %s73 = sphi 0, %s71
      %s74 = sphi 0, %s73
      %s88 = sphi 0, %s74
      %s94 = sphi 0, %s96
      %s97 = sphi 0, %s94
      %s98 = sphi 0, %s97
      %s114 = sphi 0, %s98
    $region4: #{tpu_custom_call.1} parent=1 // loop_header_branch
      %19 = sbr.rel (%p17) target = $region8
    $region5: #{tpu_custom_call.1} parent=1 // loop_body
      %s21 = ssub.s32 %s16, 1
      %s22 = ssub.s32 %s16, 2
      %s23 = sadd.s32 %s16, 1
      %s24 = ssub.s32 %s16, %s23
      %p25 = scmp.eq.s32.totalorder %s24, 0
      %s27 = sadd.s32 %s26, 1
      %s28 = scalar_select %p25, %s26, %s27
      %p31 = pneg %p25
      %p32 = scmp.eq.s32.totalorder %s16, 1
      %p33 = por %p31, %p32
      %p34 = scmp.ne.s32.totalorder %s26, %s29
      %p35 = scmp.eq.s32.totalorder %s16, 0
      %p36 = por %p34, %p35
      %p37 = scmp.ne.s32.totalorder %s26, %s29
      %p38 = scmp.eq.s32.totalorder %s21, 1
      %p39 = por %p37, %p38
      %p40 = scmp.ne.s32.totalorder %s29, %s30
      %p41 = scmp.eq.s32.totalorder %s21, 0
      %p42 = por %p40, %p41
      %p43 = scmp.ne.s32.totalorder %s29, %s30
      %p44 = scmp.eq.s32.totalorder %s22, 1
      %p45 = por %p43, %p44
      %p47 = scmp.ne.s32.totalorder %s30, %s46
      %p48 = scmp.eq.s32.totalorder %s22, 0
      %p49 = por %p47, %p48
      %s51 = sadd.s32 %s50, 1
      %p54 = scmp.eq.s32.totalorder %s16, 1
      %p55 = scmp.ne.s32.totalorder %s50, %s52
      %p56 = scmp.eq.s32.totalorder %s16, 0
      %p57 = por %p55, %p56
      %p58 = scmp.ne.s32.totalorder %s50, %s52
      %p59 = scmp.eq.s32.totalorder %s21, 1
      %p60 = por %p58, %p59
      %p61 = scmp.ne.s32.totalorder %s52, %s53
      %p62 = scmp.eq.s32.totalorder %s21, 0
      %p63 = por %p61, %p62
      %p64 = scmp.ne.s32.totalorder %s52, %s53
      %p65 = scmp.eq.s32.totalorder %s22, 1
      %p66 = por %p64, %p65
      %p68 = scmp.ne.s32.totalorder %s53, %s67
      %p69 = scmp.eq.s32.totalorder %s22, 0
      %p70 = por %p68, %p69
      %s72 = sadd.s32 %s71, 1
      %p75 = scmp.eq.s32.totalorder %s16, 1
      %p76 = scmp.ne.s32.totalorder %s71, %s73
      %p77 = scmp.eq.s32.totalorder %s16, 0
      %p78 = por %p76, %p77
      %p79 = scmp.ne.s32.totalorder %s71, %s73
      %p80 = scmp.eq.s32.totalorder %s21, 1
      %p81 = por %p79, %p80
      %p82 = scmp.ne.s32.totalorder %s73, %s74
      %p83 = scmp.eq.s32.totalorder %s21, 0
      %p84 = por %p82, %p83
      %p85 = scmp.ne.s32.totalorder %s73, %s74
      %p86 = scmp.eq.s32.totalorder %s22, 1
      %p87 = por %p85, %p86
      %p89 = scmp.ne.s32.totalorder %s74, %s88
      %p90 = scmp.eq.s32.totalorder %s22, 0
      %p91 = por %p89, %p90
      %s92 = ssub.s32 %s16, %s23
      %p93 = scmp.eq.s32.totalorder %s92, 0
      %s95 = sadd.s32 %s94, 1
      %s96 = scalar_select %p93, %s94, %s95
      %p99 = pneg %p93
      %p100 = scmp.eq.s32.totalorder %s16, 1
      %p101 = por %p99, %p100
      %p102 = scmp.ne.s32.totalorder %s94, %s97
      %p103 = scmp.eq.s32.totalorder %s16, 0
      %p104 = por %p102, %p103
      %p105 = scmp.ne.s32.totalorder %s94, %s97
      %p106 = scmp.eq.s32.totalorder %s21, 1
      %p107 = por %p105, %p106
      %p108 = scmp.ne.s32.totalorder %s97, %s98
      %p109 = scmp.eq.s32.totalorder %s21, 0
      %p110 = por %p108, %p109
      %p111 = scmp.ne.s32.totalorder %s97, %s98
      %p112 = scmp.eq.s32.totalorder %s22, 1
      %p113 = por %p111, %p112
      %p115 = scmp.ne.s32.totalorder %s98, %s114
      %p116 = scmp.eq.s32.totalorder %s22, 0
      %p117 = por %p115, %p116
      %p118 = scmp.le.s32.totalorder 1, %s16
      %p119 = scmp.lt.s32.totalorder %s16, 3
      %p120 = pnand %p118, %p119
      %p121 = pneg %p120
      // Predicated region
      $region9: #{tpu_custom_call.1} parent=5 // pred_check
        _
      $region10: #{tpu_custom_call.1} parent=5 // pred_check_branch
        %123 = sbr.rel (%p120) target = $region12
      $region11: #{tpu_custom_call.1} parent=5 // pred_region
        %s124 = ssub.s32 %s16, 1
        // Predicated region
        $region13: #{tpu_custom_call.1} parent=11 // pred_check
          %p125 = pneg %p63
        $region14: #{tpu_custom_call.1} parent=11 // pred_check_branch
          %127 = sbr.rel (%p125) target = $region16
        $region15: #{tpu_custom_call.1} parent=11 // pred_region
          %s129 = ssub.s32 64, 64
          %130 = vsyncadd [#allocation6], %s129
          %s132 = sshll.u32 [#allocation5], 4
          %s133 = int_to_ptr.vmem [resolvable:$true] %s132
          %135 = dma.hbm_to_vmem [thread:$0]  %s1, 64, %s133, [#allocation6]
        $region16: #{tpu_custom_call.1} parent=11 // pred_fallthru
          _
        // Predicated region
        $region17: #{tpu_custom_call.1} parent=11 // pred_check
          %p136 = pneg %p84
        $region18: #{tpu_custom_call.1} parent=11 // pred_check_branch
          %138 = sbr.rel (%p136) target = $region20
        $region19: #{tpu_custom_call.1} parent=11 // pred_region
          _
        $region20: #{tpu_custom_call.1} parent=11 // pred_fallthru
          _
      $region12: #{tpu_custom_call.1} parent=5 // pred_fallthru
        _
      %p139 = scmp.lt.s32.totalorder %s16, 2
      // Predicated region
      $region21: #{tpu_custom_call.1} parent=5 // pred_check
        %p140 = pneg %p139
      $region22: #{tpu_custom_call.1} parent=5 // pred_check_branch
        %142 = sbr.rel (%p140) target = $region24
      $region23: #{tpu_custom_call.1} parent=5 // pred_region
        // Predicated region
        $region25: #{tpu_custom_call.1} parent=23 // pred_check
          %p143 = pneg %p36
        $region26: #{tpu_custom_call.1} parent=23 // pred_check_branch
          %145 = sbr.rel (%p143) target = $region28
        $region27: #{tpu_custom_call.1} parent=23 // pred_region
          %s146 = sand.u32 %s26, 1
          %s147 = scalar_lea.sflag [#allocation3], %s146
          %s148 = sand.u32 %s26, 1
          %s149 = smul.addr %s148, 8
          %s150 = scalar_lea.vmem [#allocation2], %s149
          %s152 = ssub.s32 128, 128
          %153 = vsyncadd %s147, %s152
          %s154 = smul.addr %s16, 2
          %s155 = smul.addr %s154, 64
          %s156 = scalar_lea.hbm %s0, %s155
          %s158 = sshll.u32 %s150, 4
          %s159 = int_to_ptr.vmem [resolvable:$true] %s158
          %161 = dma.hbm_to_vmem [thread:$0]  %s156, 128, %s159, %s147
        $region28: #{tpu_custom_call.1} parent=23 // pred_fallthru
          _
      $region24: #{tpu_custom_call.1} parent=5 // pred_fallthru
        _
      %p162 = scmp.le.s32.totalorder 1, %s16
      %p163 = scmp.lt.s32.totalorder %s16, 3
      %p164 = pnand %p162, %p163
      %p165 = pneg %p164
      // Predicated region
      $region29: #{tpu_custom_call.1} parent=5 // pred_check
        _
      $region30: #{tpu_custom_call.1} parent=5 // pred_check_branch
        %167 = sbr.rel (%p164) target = $region32
      $region31: #{tpu_custom_call.1} parent=5 // pred_region
        %s168 = ssub.s32 %s16, 1
        %s169 = sand.u32 %s29, 1
        %s170 = scalar_lea.sflag [#allocation3], %s169
        %s171 = sand.u32 %s29, 1
        %s172 = smul.addr %s171, 8
        %s173 = scalar_lea.vmem [#allocation2], %s172
        // Predicated region
        $region33: #{tpu_custom_call.1} parent=31 // pred_check
          %p174 = pneg %p42
        $region34: #{tpu_custom_call.1} parent=31 // pred_check_branch
          %176 = sbr.rel (%p174) target = $region36
        $region35: #{tpu_custom_call.1} parent=31 // pred_region
          %177 = dma.done %s170, 128
        $region36: #{tpu_custom_call.1} parent=31 // pred_fallthru
          _
        // Predicated region
        $region37: #{tpu_custom_call.1} parent=31 // pred_check
          %p178 = pneg %p63
        $region38: #{tpu_custom_call.1} parent=31 // pred_check_branch
          %180 = sbr.rel (%p178) target = $region40
        $region39: #{tpu_custom_call.1} parent=31 // pred_region
          %181 = dma.done [#allocation6], 64
        $region40: #{tpu_custom_call.1} parent=31 // pred_fallthru
          _
        %s182 = sand.u32 %s29, 1
        %s183 = scalar_lea.sflag [#allocation3], %s182
        %s184 = sand.u32 %s29, 1
        %s185 = smul.addr %s184, 8
        %s186 = scalar_lea.vmem [#allocation2], %s185
        %p187 = pneg %p42
        %p188 = pneg %p39
        %p189 = pneg %p63
        %p190 = pneg %p60
        %p191 = pneg %p84
        %p192 = pneg %p81
        %p193 = pneg %p110
        %p194 = pneg %p107
        %s195 = sand.u32 %s97, 1
        %s196 = scalar_lea.sflag [#allocation4], %s195
        %s197 = sand.u32 %s97, 1
        %s198 = smul.addr %s197, 8
        %s199 = scalar_lea.vmem [#allocation7], %s198
        %v200 = vld [vmem:[%s173] sm:$0xff]
        %v201 = vlaneseq
        %v202 = vand.u32 %v201, 127
        %v203 = vadd.s32 %v202, 128
        %vm204 = vcmp.lt.s32.totalorder %v202, 0
        %v205 = vsub.s32 0, %v202
        %v206 = vsel %vm204, %v205, %v202
        %v207 = vshrl.u32 %v206, 4
        %v208 = vand.u32 %v206, 15
        %v209 = vsub.s32 0, %v208
        %v210 = vsel %vm204, %v209, %v208
        %vm211 = vcmp.lt.s32.totalorder %v203, 0
        %v212 = vsub.s32 0, %v203
        %v213 = vsel %vm211, %v212, %v203
        %v214 = vshrl.u32 %v213, 4
        %v215 = vand.u32 %v213, 15
        %v216 = vsub.s32 0, %v215
        %v217 = vsel %vm211, %v216, %v215
        %vm218 = vcmp.ne.s32.totalorder %v210, 0
        %vm219 = vcmp.ne.s32.totalorder %v217, 0
        %vm220 = vcmp.lt.s32.totalorder %v210, 0
        %vm221 = vcmp.lt.s32.totalorder %v217, 0
        %vm222 = vmand %vm220, %vm218
        %vm223 = vmand %vm221, %vm219
        %v224 = vadd.s32 %v210, 16
        %v225 = vadd.s32 %v217, 16
        %v226 = vsel %vm222, %v224, %v210
        %v227 = vsel %vm223, %v225, %v217
        %vm228 = vcmp.eq.s32.totalorder %v226, 0
        %vm229 = vcmp.eq.s32.totalorder %v227, 0
        %vm230 = vcmp.eq.s32.totalorder %v226, 15
        %vm231 = vcmp.eq.s32.totalorder %v227, 15
        %vm232 = vcmp.lt.s32.totalorder %v202, 16
        %vm233 = vcmp.lt.s32.totalorder %v203, 16
        %vm234 = vcmp.ge.s32.totalorder %v202, 240
        %vm235 = vcmp.ge.s32.totalorder %v203, 240
        %v237 = vcombine.high %v200, %v200
        %239 = vrot.lane.b32.xlu0 %v200, 16
        %v240 = vpop.permute.xlu0 %239
        %241 = vrot.lane.b32.xlu0 %v237, 16
        %v242 = vpop.permute.xlu0 %241
        %v243 = vsel %vm232, %v240, %v242
        %v244 = vsel %vm232, %v242, %v240
        %245 = vrot.lane.b32.xlu0 %v200, 112
        %v246 = vpop.permute.xlu0 %245
        %247 = vrot.lane.b32.xlu0 %v237, 112
        %v248 = vpop.permute.xlu0 %247
        %vm249 = vcmp.lt.s32.totalorder %v202, 112
        %v250 = vsel %vm249, %v246, %v248
        %v251 = vsel %vm249, %v248, %v246
        %v252 = vsel %vm232, 1, 0
        %v253 = vsel %vm233, 1, 0
        %vm254 = vcmp.eq.s32.totalorder %v252, 1
        %vm255 = vcmp.eq.s32.totalorder %v253, 1
        %v256 = vsel %vm254, %v250, %v244
        %v257 = vsel %vm255, %v251, %v243
        %v258 = vsel %vm234, 1, 0
        %v259 = vsel %vm235, 1, 0
        %vm260 = vcmp.eq.s32.totalorder %v258, 1
        %vm261 = vcmp.eq.s32.totalorder %v259, 1
        %v262 = vsel %vm260, %v244, %v250
        %v263 = vsel %vm261, %v243, %v251
        %264 = vrot.lane.b32.xlu0 %v256, 1
        %v265 = vpop.permute.xlu0 %264
        %266 = vrot.lane.b32.xlu0 %v257, 1
        %v267 = vpop.permute.xlu0 %266
        %vm268 = vcmp.lt.s32.totalorder %v202, 1
        %v269 = vsel %vm268, %v265, %v267
        %v270 = vsel %vm268, %v267, %v265
        %271 = vrot.lane.b32.xlu0 %v256, 127
        %v272 = vpop.permute.xlu0 %271
        %273 = vrot.lane.b32.xlu0 %v257, 127
        %v274 = vpop.permute.xlu0 %273
        %vm275 = vcmp.lt.s32.totalorder %v202, 127
        %v276 = vsel %vm275, %v272, %v274
        %v277 = vsel %vm275, %v274, %v272
        %v278 = vsel %vm228, 1, 0
        %v279 = vsel %vm229, 1, 0
        %vm280 = vcmp.eq.s32.totalorder %v278, 1
        %vm281 = vcmp.eq.s32.totalorder %v279, 1
        %v282 = vsel %vm280, %v276, %v270
        %v283 = vsel %vm281, %v277, %v269
        %v284 = vsel %vm230, 1, 0
        %v285 = vsel %vm231, 1, 0
        %vm286 = vcmp.eq.s32.totalorder %v284, 1
        %vm287 = vcmp.eq.s32.totalorder %v285, 1
        %v288 = vsel %vm286, %v270, %v276
        %v289 = vsel %vm287, %v269, %v277
        %290 = vrot.lane.b32.xlu0 %v200, 1
        %v291 = vpop.permute.xlu0 %290
        %292 = vrot.lane.b32.xlu0 %v237, 1
        %v293 = vpop.permute.xlu0 %292
        %v294 = vsel %vm268, %v291, %v293
        %v295 = vsel %vm268, %v293, %v291
        %296 = vrot.lane.b32.xlu0 %v200, 127
        %v297 = vpop.permute.xlu0 %296
        %298 = vrot.lane.b32.xlu0 %v237, 127
        %v299 = vpop.permute.xlu0 %298
        %v300 = vsel %vm275, %v297, %v299
        %v301 = vsel %vm275, %v299, %v297
        %v302 = vsel %vm280, %v300, %v295
        %v303 = vsel %vm281, %v301, %v294
        %v304 = vsel %vm286, %v295, %v300
        %v305 = vsel %vm287, %v294, %v301
        %306 = vrot.lane.b32.xlu0 %v262, 1
        %v307 = vpop.permute.xlu0 %306
        %308 = vrot.lane.b32.xlu0 %v263, 1
        %v309 = vpop.permute.xlu0 %308
        %v310 = vsel %vm268, %v307, %v309
        %v311 = vsel %vm268, %v309, %v307
        %312 = vrot.lane.b32.xlu0 %v262, 127
        %v313 = vpop.permute.xlu0 %312
        %314 = vrot.lane.b32.xlu0 %v263, 127
        %v315 = vpop.permute.xlu0 %314
        %v316 = vsel %vm275, %v313, %v315
        %v317 = vsel %vm275, %v315, %v313
        %v318 = vsel %vm280, %v316, %v311
        %v319 = vsel %vm281, %v317, %v310
        %v320 = vsel %vm286, %v311, %v316
        %v321 = vsel %vm287, %v310, %v317
        %v324 = vrot.slane %v256, 4
        %v325 = vrot.slane %v257, 4
        %v330 = vrot.slane %v302, 4
        %v331 = vrot.slane %v303, 4
        %v336 = vrot.slane %v304, 4
        %v337 = vrot.slane %v305, 4
        %v342 = vrot.slane %v262, 4
        %v343 = vrot.slane %v263, 4
        %vm346 = vcmask 1043456
        %v347 = vsel %vm346, %v282, %v324
        %v348 = vsel %vm346, %v283, %v325
        %v349 = vsel %vm346, %v288, %v330
        %v350 = vsel %vm346, %v289, %v331
        %v351 = vsel %vm346, %v200, %v336
        %v352 = vsel %vm346, %v237, %v337
        %v353 = vsel %vm346, %v318, %v342
        %v354 = vsel %vm346, %v319, %v343
        %v355 = vld [vmem:[#allocation5] sm:$0xf]
        %vm356 = vcmask 293888
        %v358 = vsel %vm356, %v355, 0
        %v361 = vsel %vm346, %v320, 0
        %v364 = vsel %vm346, %v321, 0
        %366 = vmatprep.subr.mxu0 %v348
        %367 = vmatpush1.msra.mxu0 %v347
        %368 = vmatprep.subr.mxu0 %v350
        %369 = vmatpush1.msra.mxu0 %v349
        %370 = vmatprep.subr.mxu0 %v352
        %371 = vmatpush1.msra.mxu0 %v351
        %372 = vmatprep.subr.mxu0 %v354
        %373 = vmatpush1.msra.mxu0 %v353
        %374 = vmatprep.subr.mxu0 %v364
        %375 = vmatpush1.msra.mxu0 %v361
        %376 = vmatprep.subr.mxu0 0.0
        %377 = vmatpush1.msra.mxu0 0.0
        %378 = vmatprep.subr.mxu0 0.0
        %379 = vmatpush1.msra.mxu0 0.0
        %380 = vmatprep.subr.mxu0 0.0
        %381 = vmatpush1.msra.mxu0 0.0
        %382 = vmatprep.subr.mxu0 0.0
        %383 = vmatpush1.msra.mxu0 0.0
        %384 = vmatprep.subr.mxu0 0.0
        %385 = vmatpush1.msra.mxu0 0.0
        %386 = vmatprep.subr.mxu0 0.0
        %387 = vmatpush1.msra.mxu0 0.0
        %388 = vmatprep.subr.mxu0 0.0
        %389 = vmatpush1.msra.mxu0 0.0
        %390 = vmatprep.subr.mxu0 0.0
        %391 = vmatpush1.msra.mxu0 0.0
        %392 = vmatprep.subr.mxu0 0.0
        %393 = vmatpush1.msra.mxu0 0.0
        %394 = vmatprep.subr.mxu0 0.0
        %395 = vmatpush1.msra.mxu0 0.0
        %396 = vmatprep.subr.mxu0 0.0
        %397 = vmatpush1.msra.mxu0 0.0
        %398 = vmatprep.subr.mxu0 0.0
        %399 = vmatpush1.msra.mxu0 0.0
        %400 = vmatprep.subr.mxu0 0.0
        %401 = vmatpush1.msra.mxu0 0.0
        %402 = vmatprep.subr.mxu0 0.0
        %403 = vmatpush1.msra.mxu0 0.0
        %404 = vmatprep.subr.mxu0 0.0
        %405 = vmatpush1.msra.mxu0 0.0
        %406 = vmatprep.subr.mxu0 0.0
        %407 = vmatpush1.msra.mxu0 0.0
        %408 = vmatprep.subr.mxu0 0.0
        %409 = vmatpush1.msra.mxu0 0.0
        %410 = vmatprep.subr.mxu0 0.0
        %411 = vmatpush1.msra.mxu0 0.0
        %412 = vmatprep.subr.mxu0 0.0
        %413 = vmatpush1.msra.mxu0 0.0
        %414 = vmatprep.subr.mxu0 0.0
        %415 = vmatpush1.msra.mxu0 0.0
        %416 = vmatprep.subr.mxu0 0.0
        %417 = vmatpush1.msra.mxu0 0.0
        %418 = vmatprep.subr.mxu0 0.0
        %419 = vmatpush1.msra.mxu0 0.0
        %420 = vmatprep.subr.mxu0 0.0
        %421 = vmatpush1.msra.mxu0 0.0
        %422 = vmatprep.subr.mxu0 0.0
        %423 = vmatpush1.msra.mxu0 0.0
        %424 = vmatprep.subr.mxu0 0.0
        %425 = vmatpush1.msra.mxu0 0.0
        %426 = vmatprep.subr.mxu0 0.0
        %427 = vmatpush1.msra.mxu0 0.0
        %428 = vmatprep.subr.mxu0 0.0
        %429 = vmatpush1.msra.mxu0 0.0
        %430 = vmatprep.mubr.f32.mxu0 0.0
        %431 = vmatmul.mubr.f32.gmra.mrb[0].mxu0 %v358
        %v432 = vpop.f32.mrb[0].mxu0
        %v433 = vadd.f32 0.0, %v432
        %v434 = vpop.f32.mrb[0].mxu0
        %v435 = vadd.f32 0.0, %v434
        %436 = vdwg.mxu0
        %v437 = vsel %vm346, %v433, 0.0
        %v438 = vsel %vm346, %v435, 0.0
        %v439 = vadd.f32 %v437, %v438
        %440 = vadd.xlane.f32.xlu0 %v439
        %v441 = vpop.xlane.xlu0 %440
        %v442 = vmul.f32 %v433, %v433
        %v443 = vmul.f32 %v435, %v435
        %v444 = vsel %vm346, %v442, 0.0
        %v445 = vsel %vm346, %v443, 0.0
        %v446 = vadd.f32 %v444, %v445
        %447 = vadd.xlane.f32.xlu0 %v446
        %v448 = vpop.xlane.xlu0 %447
        %v449 = vmul.f32 %v441, 0.00390625
        %v450 = vmul.f32 %v448, 0.00390625
        %v451 = vmul.f32 %v449, %v449
        %v452 = vsub.f32 %v450, %v451
        %v453 = vmax.f32 %v452, 0.0
        %v454 = vsub.f32 %v433, %v449
        %v455 = vsub.f32 %v435, %v449
        %v456 = vadd.f32 %v453, 1e-05
        %v457 = vrsqrt.pop %v456
        %v458 = vmul.f32 %v454, %v457
        %v459 = vmul.f32 %v455, %v457
        %v460 = vmax.f32 %v458, 0.0
        %v461 = vmax.f32 %v459, 0.0
        %462 = vrot.lane.b32.xlu0 %v460, 16
        %v463 = vpop.permute.xlu0 %462
        %464 = vrot.lane.b32.xlu0 %v461, 16
        %v465 = vpop.permute.xlu0 %464
        %v466 = vsel %vm232, %v463, %v465
        %v467 = vsel %vm232, %v465, %v463
        %468 = vrot.lane.b32.xlu0 %v460, 112
        %v469 = vpop.permute.xlu0 %468
        %470 = vrot.lane.b32.xlu0 %v461, 112
        %v471 = vpop.permute.xlu0 %470
        %v472 = vsel %vm249, %v469, %v471
        %v473 = vsel %vm249, %v471, %v469
        %v474 = vsel %vm254, %v472, %v467
        %v475 = vsel %vm255, %v473, %v466
        %v476 = vsel %vm260, %v467, %v472
        %v477 = vsel %vm261, %v466, %v473
        %478 = vrot.lane.b32.xlu0 %v474, 1
        %v479 = vpop.permute.xlu0 %478
        %480 = vrot.lane.b32.xlu0 %v475, 1
        %v481 = vpop.permute.xlu0 %480
        %v482 = vsel %vm268, %v479, %v481
        %v483 = vsel %vm268, %v481, %v479
        %484 = vrot.lane.b32.xlu0 %v474, 127
        %v485 = vpop.permute.xlu0 %484
        %486 = vrot.lane.b32.xlu0 %v475, 127
        %v487 = vpop.permute.xlu0 %486
        %v488 = vsel %vm275, %v485, %v487
        %v489 = vsel %vm275, %v487, %v485
        %v490 = vsel %vm280, %v488, %v483
        %v491 = vsel %vm281, %v489, %v482
        %v492 = vsel %vm286, %v483, %v488
        %v493 = vsel %vm287, %v482, %v489
        %494 = vrot.lane.b32.xlu0 %v460, 1
        %v495 = vpop.permute.xlu0 %494
        %496 = vrot.lane.b32.xlu0 %v461, 1
        %v497 = vpop.permute.xlu0 %496
        %v498 = vsel %vm268, %v495, %v497
        %v499 = vsel %vm268, %v497, %v495
        %500 = vrot.lane.b32.xlu0 %v460, 127
        %v501 = vpop.permute.xlu0 %500
        %502 = vrot.lane.b32.xlu0 %v461, 127
        %v503 = vpop.permute.xlu0 %502
        %v504 = vsel %vm275, %v501, %v503
        %v505 = vsel %vm275, %v503, %v501
        %v506 = vsel %vm280, %v504, %v499
        %v507 = vsel %vm281, %v505, %v498
        %v508 = vsel %vm286, %v499, %v504
        %v509 = vsel %vm287, %v498, %v505
        %510 = vrot.lane.b32.xlu0 %v476, 1
        %v511 = vpop.permute.xlu0 %510
        %512 = vrot.lane.b32.xlu0 %v477, 1
        %v513 = vpop.permute.xlu0 %512
        %v514 = vsel %vm268, %v511, %v513
        %v515 = vsel %vm268, %v513, %v511
        %516 = vrot.lane.b32.xlu0 %v476, 127
        %v517 = vpop.permute.xlu0 %516
        %518 = vrot.lane.b32.xlu0 %v477, 127
        %v519 = vpop.permute.xlu0 %518
        %v520 = vsel %vm275, %v517, %v519
        %v521 = vsel %vm275, %v519, %v517
        %v522 = vsel %vm280, %v520, %v515
        %v523 = vsel %vm281, %v521, %v514
        %v524 = vsel %vm286, %v515, %v520
        %v525 = vsel %vm287, %v514, %v521
        %v528 = vrot.slane %v474, 4
        %v529 = vrot.slane %v475, 4
        %v534 = vrot.slane %v506, 4
        %v535 = vrot.slane %v507, 4
        %v540 = vrot.slane %v508, 4
        %v541 = vrot.slane %v509, 4
        %v546 = vrot.slane %v476, 4
        %v547 = vrot.slane %v477, 4
        %v550 = vsel %vm346, %v490, %v528
        %v551 = vsel %vm346, %v491, %v529
        %v552 = vsel %vm346, %v492, %v534
        %v553 = vsel %vm346, %v493, %v535
        %v554 = vsel %vm346, %v460, %v540
        %v555 = vsel %vm346, %v461, %v541
        %v556 = vsel %vm346, %v522, %v546
        %v557 = vsel %vm346, %v523, %v547
        %v558 = vld [vmem:[%s2] sm:$0xf]
        %v560 = vsel %vm356, %v558, 0
        %v563 = vsel %vm346, %v524, 0
        %v566 = vsel %vm346, %v525, 0
        %568 = vmatprep.subr.mxu0 %v551
        %569 = vmatpush1.msra.mxu0 %v550
        %570 = vmatprep.subr.mxu0 %v553
        %571 = vmatpush1.msra.mxu0 %v552
        %572 = vmatprep.subr.mxu0 %v555
        %573 = vmatpush1.msra.mxu0 %v554
        %574 = vmatprep.subr.mxu0 %v557
        %575 = vmatpush1.msra.mxu0 %v556
        %576 = vmatprep.subr.mxu0 %v566
        %577 = vmatpush1.msra.mxu0 %v563
        %578 = vmatprep.subr.mxu0 0.0
        %579 = vmatpush1.msra.mxu0 0.0
        %580 = vmatprep.subr.mxu0 0.0
        %581 = vmatpush1.msra.mxu0 0.0
        %582 = vmatprep.subr.mxu0 0.0
        %583 = vmatpush1.msra.mxu0 0.0
        %584 = vmatprep.subr.mxu0 0.0
        %585 = vmatpush1.msra.mxu0 0.0
        %586 = vmatprep.subr.mxu0 0.0
        %587 = vmatpush1.msra.mxu0 0.0
        %588 = vmatprep.subr.mxu0 0.0
        %589 = vmatpush1.msra.mxu0 0.0
        %590 = vmatprep.subr.mxu0 0.0
        %591 = vmatpush1.msra.mxu0 0.0
        %592 = vmatprep.subr.mxu0 0.0
        %593 = vmatpush1.msra.mxu0 0.0
        %594 = vmatprep.subr.mxu0 0.0
        %595 = vmatpush1.msra.mxu0 0.0
        %596 = vmatprep.subr.mxu0 0.0
        %597 = vmatpush1.msra.mxu0 0.0
        %598 = vmatprep.subr.mxu0 0.0
        %599 = vmatpush1.msra.mxu0 0.0
        %600 = vmatprep.subr.mxu0 0.0
        %601 = vmatpush1.msra.mxu0 0.0
        %602 = vmatprep.subr.mxu0 0.0
        %603 = vmatpush1.msra.mxu0 0.0
        %604 = vmatprep.subr.mxu0 0.0
        %605 = vmatpush1.msra.mxu0 0.0
        %606 = vmatprep.subr.mxu0 0.0
        %607 = vmatpush1.msra.mxu0 0.0
        %608 = vmatprep.subr.mxu0 0.0
        %609 = vmatpush1.msra.mxu0 0.0
        %610 = vmatprep.subr.mxu0 0.0
        %611 = vmatpush1.msra.mxu0 0.0
        %612 = vmatprep.subr.mxu0 0.0
        %613 = vmatpush1.msra.mxu0 0.0
        %614 = vmatprep.subr.mxu0 0.0
        %615 = vmatpush1.msra.mxu0 0.0
        %616 = vmatprep.subr.mxu0 0.0
        %617 = vmatpush1.msra.mxu0 0.0
        %618 = vmatprep.subr.mxu0 0.0
        %619 = vmatpush1.msra.mxu0 0.0
        %620 = vmatprep.subr.mxu0 0.0
        %621 = vmatpush1.msra.mxu0 0.0
        %622 = vmatprep.subr.mxu0 0.0
        %623 = vmatpush1.msra.mxu0 0.0
        %624 = vmatprep.subr.mxu0 0.0
        %625 = vmatpush1.msra.mxu0 0.0
        %626 = vmatprep.subr.mxu0 0.0
        %627 = vmatpush1.msra.mxu0 0.0
        %628 = vmatprep.subr.mxu0 0.0
        %629 = vmatpush1.msra.mxu0 0.0
        %630 = vmatprep.subr.mxu0 0.0
        %631 = vmatpush1.msra.mxu0 0.0
        %632 = vmatprep.mubr.f32.mxu0 0.0
        %633 = vmatmul.mubr.f32.gmra.mrb[0].mxu0 %v560
        %v634 = vpop.f32.mrb[0].mxu0
        %v635 = vadd.f32 0.0, %v634
        %v636 = vpop.f32.mrb[0].mxu0
        %v637 = vadd.f32 0.0, %v636
        %638 = vdwg.mxu0
        %v639 = vsel %vm346, %v635, 0.0
        %v640 = vsel %vm346, %v637, 0.0
        %v641 = vadd.f32 %v639, %v640
        %642 = vadd.xlane.f32.xlu0 %v641
        %v643 = vpop.xlane.xlu0 %642
        %v644 = vmul.f32 %v635, %v635
        %v645 = vmul.f32 %v637, %v637
        %v646 = vsel %vm346, %v644, 0.0
        %v647 = vsel %vm346, %v645, 0.0
        %v648 = vadd.f32 %v646, %v647
        %649 = vadd.xlane.f32.xlu0 %v648
        %v650 = vpop.xlane.xlu0 %649
        %v651 = vmul.f32 %v643, 0.00390625
        %v652 = vmul.f32 %v650, 0.00390625
        %v653 = vmul.f32 %v651, %v651
        %v654 = vsub.f32 %v652, %v653
        %v655 = vmax.f32 %v654, 0.0
        %v656 = vsub.f32 %v635, %v651
        %v657 = vsub.f32 %v637, %v651
        %v658 = vadd.f32 %v655, 1e-05
        %v659 = vrsqrt.pop %v658
        %v660 = vmul.f32 %v656, %v659
        %v661 = vmul.f32 %v657, %v659
        %v664 = vcombine.low %v660, %v661
        %v666 = vadd.f32 %v200, %v664
        %667 = vst [vmem:[%s199] sm:$0xff] %v666
        %s668 = sand.u32 %s97, 1
        %s669 = scalar_lea.sflag [#allocation4], %s668
        %s670 = sand.u32 %s97, 1
        %s671 = smul.addr %s670, 8
        %s672 = scalar_lea.vmem [#allocation7], %s671
        // Predicated region
        $region41: #{tpu_custom_call.1} parent=31 // pred_check
          %p673 = pneg %p107
        $region42: #{tpu_custom_call.1} parent=31 // pred_check_branch
          %675 = sbr.rel (%p673) target = $region44
        $region43: #{tpu_custom_call.1} parent=31 // pred_region
          %s677 = ssub.s32 128, 128
          %678 = vsyncadd %s669, %s677
          %s679 = smul.addr %s21, 2
          %s680 = smul.addr %s679, 64
          %s681 = scalar_lea.hbm %s3, %s680
          %s683 = sshll.u32 %s672, 4
          %s684 = int_to_ptr.vmem [resolvable:$true] %s683
          %686 = dma.vmem_to_hbm [thread:$0]  %s684, 128, %s681, %s669
        $region44: #{tpu_custom_call.1} parent=31 // pred_fallthru
          _
      $region32: #{tpu_custom_call.1} parent=5 // pred_fallthru
        _
      %p687 = scmp.le.s32.totalorder 2, %s16
      // Predicated region
      $region45: #{tpu_custom_call.1} parent=5 // pred_check
        %p688 = pneg %p687
      $region46: #{tpu_custom_call.1} parent=5 // pred_check_branch
        %690 = sbr.rel (%p688) target = $region48
      $region47: #{tpu_custom_call.1} parent=5 // pred_region
        %s691 = ssub.s32 %s16, 2
        // Predicated region
        $region49: #{tpu_custom_call.1} parent=47 // pred_check
          %p692 = pneg %p113
        $region50: #{tpu_custom_call.1} parent=47 // pred_check_branch
          %694 = sbr.rel (%p692) target = $region52
        $region51: #{tpu_custom_call.1} parent=47 // pred_region
          %s695 = sand.u32 %s98, 1
          %s696 = scalar_lea.sflag [#allocation4], %s695
          %s697 = sand.u32 %s98, 1
          %s698 = smul.addr %s697, 8
          %s699 = scalar_lea.vmem [#allocation7], %s698
          %700 = dma.done %s696, 128
        $region52: #{tpu_custom_call.1} parent=47 // pred_fallthru
          _
      $region48: #{tpu_custom_call.1} parent=5 // pred_fallthru
        _
    $region6: #{tpu_custom_call.1} parent=1 // loop_footer
      %s20 = sadd.s32 1, %s16
    $region7: #{tpu_custom_call.1} parent=1 // loop_footer_branch
      %15 = sbr.rel target = $region3
    $region8: #{tpu_custom_call.1} parent=1 // loop_exit
      _
    %701 = vsyncpa [#allocation3], 1
    %s702 = scalar_lea.sflag [#allocation3], 1
    %703 = vsyncpa %s702, 1
    %704 = vsyncpa [#allocation6], 1
    %705 = vsyncpa [#allocation4], 1
    %s706 = scalar_lea.sflag [#allocation4], 1
    %707 = vsyncpa %s706, 1

</llo_original>
